<compile_context>
chip_gen: v5e
topology: v5e:2x2
jax: 0.10.0
libtpu: 0.0.40
codegen_flags: <defaults>
</compile_context>

<pallas_src>
import functools

import jax
import jax.numpy as jnp
from jax.experimental import pallas as pl
from jax.experimental.pallas import tpu as pltpu


_TARGET_BLOCK_BYTES = 6 * 1024 * 1024   # in + out bytes moved per grid step
_VMEM_LIMIT_BYTES = 48 * 1024 * 1024    # > v5e/v6e scoped defaults, < v7x physical


def _round_up(x, m):
    return ((x + m - 1) // m) * m


def _sublane_multiple(dtype):
    # f32 -> 8, bf16/f16 -> 16, int8/fp8 -> 32 (second-to-last block dim).
    return max(8, 32 // jnp.dtype(dtype).itemsize)


def _choose_group(H, W, S):
    """Smallest divisor G of H whose output row (G*S*S*W) is lane-dense
    (>=256), with the contraction width G*W capped to keep the one-hot
    matmul cheap relative to HBM bandwidth."""
    divisors = [d for d in range(1, H + 1) if H % d == 0]
    for d in divisors:
        if d * W * S * S >= 256 and d * W <= 512:
            return d
    best = 1
    for d in divisors:
        if d * W <= 512:
            best = d
    return best


def _replication_matrix(W, G, S, dtype):
    """One-hot M of shape (G*W, G*S*S*W): x_row_group @ M equals the nearest
    upsampled data, flattened exactly in NCHW output memory order."""
    cols = jnp.arange(G * S * S * W)
    src = (cols // (S * S * W)) * W + ((cols % (S * W)) // S)
    return (src[None, :] == jnp.arange(G * W)[:, None]).astype(dtype)


def _row_tile(num_rows, bytes_per_row, sub):
    """Row tile: multiple of the sublane packing, ~_TARGET_BLOCK_BYTES of
    in+out traffic per step, and >=2 grid steps when there is enough work."""
    t = (_TARGET_BLOCK_BYTES // max(bytes_per_row, 1)) // sub * sub
    t = max(sub, t)
    t = min(t, num_rows)
    if t == num_rows and num_rows > sub:
        t = _round_up(pl.cdiv(num_rows, 2), sub)   # shard across 2 TCs (v7x)
    return t


def _matmul_upsample_kernel(x_ref, m_ref, o_ref, *, precision):
    # x_ref: (T, G*W); m_ref: (G*W, G*S*S*W) one-hot; o_ref: (T, G*S*S*W).
    o_ref[...] = jnp.dot(
        x_ref[...], m_ref[...],
        precision=precision,
        preferred_element_type=jnp.float32,
    ).astype(o_ref.dtype)


def _repeat_upsample_kernel(x_ref, o_ref, *, scale):
    # Fallback path. x_ref: (T, W); o_ref: (T*scale, W*scale).
    x = x_ref[...]
    x = jnp.repeat(x, scale, axis=0)            # sublane replication
    o_ref[...] = jnp.repeat(x, scale, axis=1)   # lane replication


def interpolate_nearest(x, scale_factor=2):
    """Equivalent of F.interpolate(x, scale_factor=S, mode='nearest'), NCHW."""
    N, C, H, W = x.shape
    S = int(scale_factor)
    if S == 1:
        return x
    dtype = x.dtype
    itemsize = jnp.dtype(dtype).itemsize
    sub = _sublane_multiple(dtype)
    R = N * C * H
    Ho, Wo = H * S, W * S
    bytes_accessed = (1 + S * S) * N * C * H * W * itemsize

    use_mxu = bool(jnp.issubdtype(dtype, jnp.floating)) and W <= 512

    if use_mxu:
        G = _choose_group(H, W, S)              # G | H  =>  G | R
        RG = R // G
        GW = G * W
        OW = GW * S * S
        M = _replication_matrix(W, G, S, dtype)
        x2 = x.reshape(RG, GW)                  # contiguous view of NCHW input
        T = _row_tile(RG, GW * itemsize * (1 + S * S), sub)
        grid = (pl.cdiv(RG, T),)
        precision = (jax.lax.Precision.HIGHEST
                     if dtype == jnp.float32 else None)
        kernel = functools.partial(_matmul_upsample_kernel, precision=precision)
        out2 = pl.pallas_call(
            kernel,
            out_shape=jax.ShapeDtypeStruct((RG, OW), dtype),
            grid=grid,
            in_specs=[
                pl.BlockSpec((T, GW), lambda i: (i, 0)),
                pl.BlockSpec((GW, OW), lambda i: (0, 0)),  # resident one-hot M
            ],
            out_specs=pl.BlockSpec((T, OW), lambda i: (i, 0)),
            compiler_params=pltpu.CompilerParams(
                dimension_semantics=("parallel",),
                vmem_limit_bytes=_VMEM_LIMIT_BYTES,
            ),
            cost_estimate=pl.CostEstimate(
                flops=2 * RG * GW * OW,
                transcendentals=0,
                bytes_accessed=bytes_accessed,
            ),
        )(x2, M)
        # Free row-major reshape: (RG, OW) is exactly the NCHW output layout.
        return out2.reshape(N, C, Ho, Wo)

    # Fallback: very wide rows (output already lane-dense) or non-float dtypes.
    # TODO(synk): integer dtypes take this path (MXU one-hot matmul is
    # float-only) and use jnp.repeat (XLU) for the lane replication.
    x2 = x.reshape(R, W)
    T = _row_tile(R, W * itemsize * (1 + S * S), sub)
    grid = (pl.cdiv(R, T),)
    kernel = functools.partial(_repeat_upsample_kernel, scale=S)
    out2 = pl.pallas_call(
        kernel,
        out_shape=jax.ShapeDtypeStruct((R * S, W * S), dtype),
        grid=grid,
        in_specs=[pl.BlockSpec((T, W), lambda i: (i, 0))],
        out_specs=pl.BlockSpec((T * S, W * S), lambda i: (i, 0)),
        compiler_params=pltpu.CompilerParams(
            dimension_semantics=("parallel",),
            vmem_limit_bytes=_VMEM_LIMIT_BYTES,
        ),
        cost_estimate=pl.CostEstimate(
            flops=0, transcendentals=0, bytes_accessed=bytes_accessed),
    )(x2)
    return out2.reshape(N, C, Ho, Wo)


class Interpolate:
    """JAX/Pallas counterpart of the PyTorch Interpolate module.

    Implements the module's default configuration: mode='nearest' with an
    integer scale_factor (the module has no learned parameters).
    """

    def __init__(self, size=None, scale_factor=None, mode="nearest",
                 align_corners=None):
        if mode != "nearest":
            # TODO(synk): bilinear/bicubic interpolation modes not implemented.
            raise NotImplementedError("only mode='nearest' is implemented")
        if size is not None:
            # Reject explicitly instead of silently ignoring it.
            raise NotImplementedError("only scale_factor (not size) is supported")
        if scale_factor is None or int(scale_factor) != scale_factor:
            raise NotImplementedError("only integer scale_factor is implemented")
        self.scale_factor = int(scale_factor)
        self.align_corners = False if mode == "bilinear" else align_corners

    def __call__(self, x):
        return interpolate_nearest(x, scale_factor=self.scale_factor)


if __name__ == "__main__":
    key = jax.random.PRNGKey(0)
    x = jax.random.normal(key, (2, 4, 16, 16), dtype=jnp.float32)

    mod = Interpolate(scale_factor=2, mode="nearest")
    out = jax.block_until_ready(mod(x))

    # Pure-JAX reference (PyTorch nearest semantics: out[i, j] = in[i//2, j//2]).
    ref = jnp.repeat(jnp.repeat(x, 2, axis=2), 2, axis=3)

    assert out.shape == (2, 4, 32, 32), out.shape
    assert out.dtype == x.dtype
    assert bool(jnp.allclose(out, ref, rtol=1e-6, atol=1e-6)), "mismatch vs reference"

    print("KERNEL_OK")
</pallas_src>

<mosaic_0001>
module attributes {stable_mosaic.version = 11 : i64} {
  func.func @_matmul_upsample_kernel(%arg0: i32, %arg1: memref<16x64xf32, #tpu.memory_space<vmem>>, %arg2: memref<64x256xf32, #tpu.memory_space<vmem>>, %arg3: memref<16x256xf32, #tpu.memory_space<vmem>>) attributes {dimension_semantics = [#tpu.dimension_semantics<parallel>], iteration_bounds = array<i64: 2>, scalar_prefetch = 0 : i64, scratch_operands = 0 : i64, tpu.core_type = #tpu.core_type<tc>, window_params = [{transform_indices = @transform_0, window_bounds = array<i64: 16, 64>}, {pipeline_mode = #tpu.pipeline_mode<synchronous>, transform_indices = @transform_1, window_bounds = array<i64: 64, 256>}, {transform_indices = @transform_2, window_bounds = array<i64: 16, 256>}]} {
    %c0 = arith.constant 0 : index
    %c0_0 = arith.constant 0 : index
    %0 = vector.load %arg1[%c0, %c0_0] : memref<16x64xf32, #tpu.memory_space<vmem>>, vector<16x64xf32>
    %c0_1 = arith.constant 0 : index
    %c0_2 = arith.constant 0 : index
    %1 = vector.load %arg2[%c0_1, %c0_2] : memref<64x256xf32, #tpu.memory_space<vmem>>, vector<64x256xf32>
    %cst = arith.constant dense<0.000000e+00> : vector<16x256xf32>
    %2 = tpu.matmul %0, %1, %cst {dimension_numbers = #tpu.dot_dimension_numbers<[1], [0], [0], [1], [0, 0, 1, 1], [], []>, precision = #tpu.contract_precision<fp32>} : vector<16x64xf32>, vector<64x256xf32>, vector<16x256xf32> -> vector<16x256xf32>
    %c0_3 = arith.constant 0 : index
    %c0_4 = arith.constant 0 : index
    %3 = vector.load %arg3[%c0_3, %c0_4] : memref<16x256xf32, #tpu.memory_space<vmem>>, vector<16x256xf32>
    tpu.vector_store %arg3[%c0_3, %c0_4], %2 {strides = array<i32>} : memref<16x256xf32, #tpu.memory_space<vmem>>, vector<16x256xf32>,
    return
  }
  func.func @transform_0(%arg0: i32) -> (i32, i32) {
    %c0_i32 = arith.constant 0 : i32
    %c0_i32_0 = arith.constant 0 : i32
    return %arg0, %c0_i32 : i32, i32
  }
  func.func @transform_1(%arg0: i32) -> (i32, i32) {
    %c0_i32 = arith.constant 0 : i32
    %c0_i32_0 = arith.constant 0 : i32
    %c0_i32_1 = arith.constant 0 : i32
    return %c0_i32, %c0_i32_0 : i32, i32
  }
  func.func @transform_2(%arg0: i32) -> (i32, i32) {
    %c0_i32 = arith.constant 0 : i32
    %c0_i32_0 = arith.constant 0 : i32
    return %arg0, %c0_i32 : i32, i32
  }
}

</mosaic_0001>

<llo_original>
// kernel: tpu_custom_call.1
$region0: #{tpu_custom_call.1}
  #allocation0 [shape = 'u32[]', space=smem, size = 0x4, offset = 0x4, fixed_abs, tag = 'smem constant byte address 0x4 - core index']
  #allocation1 [shape = 'u32[72,128]{1,0:T(1,128)}', space=vmem, size = 0x9000, scoped, tag = 'internal scratch']
  %s0 = inlined_call_operand.hbm [shape: f32[32,64], index: 0, kind: input, shape index: {}]
  %s1 = inlined_call_operand.hbm [shape: f32[64,256], index: 1, kind: input, shape index: {}]
  %s2 = inlined_call_operand.hbm [shape: f32[32,256], index: 2, kind: output, shape index: {}]
  %s3 = sld [smem:[#allocation0]]
  $region49: #{tpu_custom_call.1} parent=0
    _
  %s5 = ssub.s32 1, %s3
  %s6 = scalar_select 0, %s5, %s3
  $region1: #{tpu_custom_call.1} parent=0
    #allocation2 [shape = 'u8[16384]{0}', space=vmem, size = 0x4000, scoped, tag = 'input window, operand 0']
    #allocation3 [shape = 's32[2]{0}', space=sflag, size = 0x8, scoped, tag = 'scoped memory for tpu_custom_call.1']
    #allocation4 [shape = 's32[2]{0}', space=sflag, size = 0x8, scoped, tag = 'scoped memory for tpu_custom_call.1']
    #allocation5 [shape = 'u8[65536]{0}', space=vmem, size = 0x10000, scoped, tag = 'input window, operand 1, single buffered']
    #allocation6 [shape = 's32[1]{0}', space=sflag, size = 0x4, scoped, tag = 'scoped memory for tpu_custom_call.1']
    #allocation7 [shape = 'u8[32768]{0}', space=vmem, size = 0x8000, scoped, tag = 'output window, operand 0']
    %7 = vsyncpa [#allocation3], 0
    %s8 = scalar_lea.sflag [#allocation3], 1
    %9 = vsyncpa %s8, 0
    %10 = vsyncpa [#allocation6], 0
    %11 = vsyncpa [#allocation4], 0
    %s12 = scalar_lea.sflag [#allocation4], 1
    %13 = vsyncpa %s12, 0
    loop: start=0, step=1, limit=4
    $region2: #{tpu_custom_call.1} parent=1 // loop_pre_header
      _
    $region3: #{tpu_custom_call.1} parent=1 // loop_header
      %s15 = sphi 0, %s19
      %p16 = scmp.ge.s32.totalorder %s15, 4
      %s25 = sphi 0, %s27
      %s28 = sphi 0, %s25
      %s29 = sphi 0, %s28
      %s45 = sphi 0, %s29
      %s49 = sphi 0, %s49
      %s51 = sphi 0, %s49
      %s52 = sphi 0, %s51
      %s66 = sphi 0, %s52
      %s72 = sphi 0, %s74
      %s75 = sphi 0, %s72
      %s76 = sphi 0, %s75
      %s92 = sphi 0, %s76
    $region4: #{tpu_custom_call.1} parent=1 // loop_header_branch
      %18 = sbr.rel (%p16) target = $region8
    $region5: #{tpu_custom_call.1} parent=1 // loop_body
      %s20 = ssub.s32 %s15, 1
      %s21 = ssub.s32 %s15, 2
      %s22 = sadd.s32 %s15, 1
      %s23 = ssub.s32 %s15, %s22
      %p24 = scmp.eq.s32.totalorder %s23, 0
      %s26 = sadd.s32 %s25, 1
      %s27 = scalar_select %p24, %s25, %s26
      %p30 = pneg %p24
      %p31 = scmp.eq.s32.totalorder %s15, 1
      %p32 = por %p30, %p31
      %p33 = scmp.ne.s32.totalorder %s25, %s28
      %p34 = scmp.eq.s32.totalorder %s15, 0
      %p35 = por %p33, %p34
      %p36 = scmp.ne.s32.totalorder %s25, %s28
      %p37 = scmp.eq.s32.totalorder %s20, 1
      %p38 = por %p36, %p37
      %p39 = scmp.ne.s32.totalorder %s28, %s29
      %p40 = scmp.eq.s32.totalorder %s20, 0
      %p41 = por %p39, %p40
      %p42 = scmp.ne.s32.totalorder %s28, %s29
      %p43 = scmp.eq.s32.totalorder %s21, 1
      %p44 = por %p42, %p43
      %p46 = scmp.ne.s32.totalorder %s29, %s45
      %p47 = scmp.eq.s32.totalorder %s21, 0
      %p48 = por %p46, %p47
      %s50 = sadd.s32 %s49, 1
      %p53 = scmp.eq.s32.totalorder %s15, 1
      %p54 = scmp.ne.s32.totalorder %s49, %s51
      %p55 = scmp.eq.s32.totalorder %s15, 0
      %p56 = por %p54, %p55
      %p57 = scmp.ne.s32.totalorder %s49, %s51
      %p58 = scmp.eq.s32.totalorder %s20, 1
      %p59 = por %p57, %p58
      %p60 = scmp.ne.s32.totalorder %s51, %s52
      %p61 = scmp.eq.s32.totalorder %s20, 0
      %p62 = por %p60, %p61
      %p63 = scmp.ne.s32.totalorder %s51, %s52
      %p64 = scmp.eq.s32.totalorder %s21, 1
      %p65 = por %p63, %p64
      %p67 = scmp.ne.s32.totalorder %s52, %s66
      %p68 = scmp.eq.s32.totalorder %s21, 0
      %p69 = por %p67, %p68
      %s70 = ssub.s32 %s15, %s22
      %p71 = scmp.eq.s32.totalorder %s70, 0
      %s73 = sadd.s32 %s72, 1
      %s74 = scalar_select %p71, %s72, %s73
      %p77 = pneg %p71
      %p78 = scmp.eq.s32.totalorder %s15, 1
      %p79 = por %p77, %p78
      %p80 = scmp.ne.s32.totalorder %s72, %s75
      %p81 = scmp.eq.s32.totalorder %s15, 0
      %p82 = por %p80, %p81
      %p83 = scmp.ne.s32.totalorder %s72, %s75
      %p84 = scmp.eq.s32.totalorder %s20, 1
      %p85 = por %p83, %p84
      %p86 = scmp.ne.s32.totalorder %s75, %s76
      %p87 = scmp.eq.s32.totalorder %s20, 0
      %p88 = por %p86, %p87
      %p89 = scmp.ne.s32.totalorder %s75, %s76
      %p90 = scmp.eq.s32.totalorder %s21, 1
      %p91 = por %p89, %p90
      %p93 = scmp.ne.s32.totalorder %s76, %s92
      %p94 = scmp.eq.s32.totalorder %s21, 0
      %p95 = por %p93, %p94
      %p96 = scmp.le.s32.totalorder 1, %s15
      %p97 = scmp.lt.s32.totalorder %s15, 3
      %p98 = pnand %p96, %p97
      %p99 = pneg %p98
      // Predicated region
      $region9: #{tpu_custom_call.1} parent=5 // pred_check
        _
      $region10: #{tpu_custom_call.1} parent=5 // pred_check_branch
        %101 = sbr.rel (%p98) target = $region12
      $region11: #{tpu_custom_call.1} parent=5 // pred_region
        %s102 = ssub.s32 %s15, 1
        // Predicated region
        $region13: #{tpu_custom_call.1} parent=11 // pred_check
          %p103 = pneg %p62
        $region14: #{tpu_custom_call.1} parent=11 // pred_check_branch
          %105 = sbr.rel (%p103) target = $region16
        $region15: #{tpu_custom_call.1} parent=11 // pred_region
          %107 = vsyncadd [#allocation6], 0
          %s108 = sshll.u32 %s1, 4
          %s109 = int_to_ptr.hbm [resolvable:$true] %s108
          %s110 = sshll.u32 [#allocation5], 4
          %s111 = int_to_ptr.vmem [resolvable:$true] %s110
          %116 = dma.hbm_to_vmem [thread:$0]  %s109, 2048, %s111, [#allocation6], 256, 256, 16
        $region16: #{tpu_custom_call.1} parent=11 // pred_fallthru
          _
      $region12: #{tpu_custom_call.1} parent=5 // pred_fallthru
        _
      %p117 = scmp.lt.s32.totalorder %s15, 2
      // Predicated region
      $region17: #{tpu_custom_call.1} parent=5 // pred_check
        %p118 = pneg %p117
      $region18: #{tpu_custom_call.1} parent=5 // pred_check_branch
        %120 = sbr.rel (%p118) target = $region20
      $region19: #{tpu_custom_call.1} parent=5 // pred_region
        // Predicated region
        $region21: #{tpu_custom_call.1} parent=19 // pred_check
          %p121 = pneg %p35
        $region22: #{tpu_custom_call.1} parent=19 // pred_check_branch
          %123 = sbr.rel (%p121) target = $region24
        $region23: #{tpu_custom_call.1} parent=19 // pred_region
          %s124 = sand.u32 %s25, 1
          %s125 = scalar_lea.sflag [#allocation3], %s124
          %s126 = sand.u32 %s25, 1
          %s127 = smul.addr %s126, 16
          %s128 = scalar_lea.vmem [#allocation2], %s127
          %s129 = smul.u32 2, %s15
          %131 = vsyncadd %s125, 0
          %s132 = smul.addr %s129, 8
          %s133 = scalar_lea.hbm %s0, %s132
          %s134 = sshll.u32 %s133, 4
          %s135 = int_to_ptr.hbm [resolvable:$true] %s134
          %s136 = sshll.u32 %s128, 4
          %s137 = int_to_ptr.vmem [resolvable:$true] %s136
          %142 = dma.hbm_to_vmem [thread:$0]  %s135, 256, %s137, %s125, 128, 128, 8
        $region24: #{tpu_custom_call.1} parent=19 // pred_fallthru
          _
      $region20: #{tpu_custom_call.1} parent=5 // pred_fallthru
        _
      %p143 = scmp.le.s32.totalorder 1, %s15
      %p144 = scmp.lt.s32.totalorder %s15, 3
      %p145 = pnand %p143, %p144
      %p146 = pneg %p145
      // Predicated region
      $region25: #{tpu_custom_call.1} parent=5 // pred_check
        _
      $region26: #{tpu_custom_call.1} parent=5 // pred_check_branch
        %148 = sbr.rel (%p145) target = $region28
      $region27: #{tpu_custom_call.1} parent=5 // pred_region
        %s149 = ssub.s32 %s15, 1
        %s150 = sand.u32 %s28, 1
        %s151 = scalar_lea.sflag [#allocation3], %s150
        %s152 = sand.u32 %s28, 1
        %s153 = smul.addr %s152, 16
        %s154 = scalar_lea.vmem [#allocation2], %s153
        // Predicated region
        $region29: #{tpu_custom_call.1} parent=27 // pred_check
          %p155 = pneg %p41
        $region30: #{tpu_custom_call.1} parent=27 // pred_check_branch
          %157 = sbr.rel (%p155) target = $region32
        $region31: #{tpu_custom_call.1} parent=27 // pred_region
          %159 = dma.done %s151, 256
        $region32: #{tpu_custom_call.1} parent=27 // pred_fallthru
          _
        // Predicated region
        $region33: #{tpu_custom_call.1} parent=27 // pred_check
          %p160 = pneg %p62
        $region34: #{tpu_custom_call.1} parent=27 // pred_check_branch
          %162 = sbr.rel (%p160) target = $region36
        $region35: #{tpu_custom_call.1} parent=27 // pred_region
          %164 = dma.done [#allocation6], 2048
        $region36: #{tpu_custom_call.1} parent=27 // pred_fallthru
          _
        %s165 = sand.u32 %s28, 1
        %s166 = scalar_lea.sflag [#allocation3], %s165
        %s167 = sand.u32 %s28, 1
        %s168 = smul.addr %s167, 16
        %s169 = scalar_lea.vmem [#allocation2], %s168
        %p170 = pneg %p41
        %p171 = pneg %p38
        %p172 = pneg %p62
        %p173 = pneg %p59
        %p174 = pneg %p88
        %p175 = pneg %p85
        %s176 = sand.u32 %s75, 1
        %s177 = scalar_lea.sflag [#allocation4], %s176
        %s178 = sand.u32 %s75, 1
        %s179 = smul.addr %s178, 32
        %s180 = scalar_lea.vmem [#allocation7], %s179
        %s181 = smul.u32 2, %s20
        %s182 = smul.u32 2, %s20
        %v183 = vld [vmem:[%s154] sm:$0xff]
        %v184 = vld [vmem:[%s154 + $0x8] sm:$0xff]
        %v185 = vld [vmem:[#allocation5] sm:$0xff]
        %v186 = vld [vmem:[#allocation5 + $0x8] sm:$0xff]
        %v187 = vld [vmem:[#allocation5 + $0x10] sm:$0xff]
        %v188 = vld [vmem:[#allocation5 + $0x18] sm:$0xff]
        %v189 = vld [vmem:[#allocation5 + $0x20] sm:$0xff]
        %v190 = vld [vmem:[#allocation5 + $0x28] sm:$0xff]
        %v191 = vld [vmem:[#allocation5 + $0x30] sm:$0xff]
        %v192 = vld [vmem:[#allocation5 + $0x38] sm:$0xff]
        %v193 = vld [vmem:[#allocation5 + $0x40] sm:$0xff]
        %v194 = vld [vmem:[#allocation5 + $0x48] sm:$0xff]
        %v195 = vld [vmem:[#allocation5 + $0x50] sm:$0xff]
        %v196 = vld [vmem:[#allocation5 + $0x58] sm:$0xff]
        %v197 = vld [vmem:[#allocation5 + $0x60] sm:$0xff]
        %v198 = vld [vmem:[#allocation5 + $0x68] sm:$0xff]
        %v199 = vld [vmem:[#allocation5 + $0x70] sm:$0xff]
        %v200 = vld [vmem:[#allocation5 + $0x78] sm:$0xff]
        %vm201 = vcmask 523264
        %v203 = vsel %vm201, %v183, 0
        %v206 = vsel %vm201, %v184, 0
        %208 = vmatpush.msra.mxu0 0.0
        %209 = vmatpush.msra.mxu0 0.0
        %210 = vmatpush.msra.mxu0 0.0
        %211 = vmatpush.msra.mxu0 0.0
        %212 = vmatpush.msra.mxu0 0.0
        %213 = vmatpush.msra.mxu0 0.0
        %214 = vmatpush.msra.mxu0 0.0
        %215 = vmatpush.msra.mxu0 0.0
        %v216 = vand.u32 %v199, 4294901760
        %217 = vmatpush.msra.mxu0 %v216
        %v218 = vand.u32 %v197, 4294901760
        %219 = vmatpush.msra.mxu0 %v218
        %v220 = vand.u32 %v195, 4294901760
        %221 = vmatpush.msra.mxu0 %v220
        %v222 = vand.u32 %v193, 4294901760
        %223 = vmatpush.msra.mxu0 %v222
        %v224 = vand.u32 %v191, 4294901760
        %225 = vmatpush.msra.mxu0 %v224
        %v226 = vand.u32 %v189, 4294901760
        %227 = vmatpush.msra.mxu0 %v226
        %v228 = vand.u32 %v187, 4294901760
        %229 = vmatpush.msra.mxu0 %v228
        %v230 = vand.u32 %v185, 4294901760
        %231 = vmatpush.msra.mxu0 %v230
        %v232 = vand.u32 %v203, 4294901760
        %v233 = vsub.f32 %v203, %v232
        %v234 = vand.u32 %v233, 4294901760
        %v235 = vsub.f32 %v233, %v234
        %v236 = vand.u32 %v235, 4294901760
        %237 = vmatmul.f32.gmra.mxu0 %v236
        %v238 = vpop.f32.mrf.mxu0
        %v239 = vadd.f32 0.0, %v238
        %v240 = vand.u32 %v206, 4294901760
        %v241 = vsub.f32 %v206, %v240
        %v242 = vand.u32 %v241, 4294901760
        %v243 = vsub.f32 %v241, %v242
        %v244 = vand.u32 %v243, 4294901760
        %245 = vmatmul.f32.gmra.mxu0 %v244
        %v246 = vpop.f32.mrf.mxu0
        %v247 = vadd.f32 0.0, %v246
        %248 = vdwg.mxu0
        %249 = vmatpush.msra.mxu0 0.0
        %250 = vmatpush.msra.mxu0 0.0
        %251 = vmatpush.msra.mxu0 0.0
        %252 = vmatpush.msra.mxu0 0.0
        %253 = vmatpush.msra.mxu0 0.0
        %254 = vmatpush.msra.mxu0 0.0
        %255 = vmatpush.msra.mxu0 0.0
        %256 = vmatpush.msra.mxu0 0.0
        %v257 = vand.u32 %v199, 4294901760
        %v258 = vsub.f32 %v199, %v257
        %v259 = vand.u32 %v258, 4294901760
        %v260 = vsub.f32 %v258, %v259
        %v261 = vand.u32 %v260, 4294901760
        %262 = vmatpush.msra.mxu0 %v261
        %v263 = vand.u32 %v197, 4294901760
        %v264 = vsub.f32 %v197, %v263
        %v265 = vand.u32 %v264, 4294901760
        %v266 = vsub.f32 %v264, %v265
        %v267 = vand.u32 %v266, 4294901760
        %268 = vmatpush.msra.mxu0 %v267
        %v269 = vand.u32 %v195, 4294901760
        %v270 = vsub.f32 %v195, %v269
        %v271 = vand.u32 %v270, 4294901760
        %v272 = vsub.f32 %v270, %v271
        %v273 = vand.u32 %v272, 4294901760
        %274 = vmatpush.msra.mxu0 %v273
        %v275 = vand.u32 %v193, 4294901760
        %v276 = vsub.f32 %v193, %v275
        %v277 = vand.u32 %v276, 4294901760
        %v278 = vsub.f32 %v276, %v277
        %v279 = vand.u32 %v278, 4294901760
        %280 = vmatpush.msra.mxu0 %v279
        %v281 = vand.u32 %v191, 4294901760
        %v282 = vsub.f32 %v191, %v281
        %v283 = vand.u32 %v282, 4294901760
        %v284 = vsub.f32 %v282, %v283
        %v285 = vand.u32 %v284, 4294901760
        %286 = vmatpush.msra.mxu0 %v285
        %v287 = vand.u32 %v189, 4294901760
        %v288 = vsub.f32 %v189, %v287
        %v289 = vand.u32 %v288, 4294901760
        %v290 = vsub.f32 %v288, %v289
        %v291 = vand.u32 %v290, 4294901760
        %292 = vmatpush.msra.mxu0 %v291
        %v293 = vand.u32 %v187, 4294901760
        %v294 = vsub.f32 %v187, %v293
        %v295 = vand.u32 %v294, 4294901760
        %v296 = vsub.f32 %v294, %v295
        %v297 = vand.u32 %v296, 4294901760
        %298 = vmatpush.msra.mxu0 %v297
        %v299 = vand.u32 %v185, 4294901760
        %v300 = vsub.f32 %v185, %v299
        %v301 = vand.u32 %v300, 4294901760
        %v302 = vsub.f32 %v300, %v301
        %v303 = vand.u32 %v302, 4294901760
        %304 = vmatpush.msra.mxu0 %v303
        %v305 = vand.u32 %v203, 4294901760
        %306 = vmatmul.f32.gmra.mxu0 %v305
        %v307 = vpop.f32.mrf.mxu0
        %v308 = vadd.f32 %v239, %v307
        %v309 = vand.u32 %v206, 4294901760
        %310 = vmatmul.f32.gmra.mxu0 %v309
        %v311 = vpop.f32.mrf.mxu0
        %v312 = vadd.f32 %v247, %v311
        %313 = vdwg.mxu0
        %314 = vmatpush.msra.mxu0 0.0
        %315 = vmatpush.msra.mxu0 0.0
        %316 = vmatpush.msra.mxu0 0.0
        %317 = vmatpush.msra.mxu0 0.0
        %318 = vmatpush.msra.mxu0 0.0
        %319 = vmatpush.msra.mxu0 0.0
        %320 = vmatpush.msra.mxu0 0.0
        %321 = vmatpush.msra.mxu0 0.0
        %v322 = vand.u32 %v199, 4294901760
        %v323 = vsub.f32 %v199, %v322
        %324 = vmatpush.msra.mxu0 %v323
        %v325 = vand.u32 %v197, 4294901760
        %v326 = vsub.f32 %v197, %v325
        %327 = vmatpush.msra.mxu0 %v326
        %v328 = vand.u32 %v195, 4294901760
        %v329 = vsub.f32 %v195, %v328
        %330 = vmatpush.msra.mxu0 %v329
        %v331 = vand.u32 %v193, 4294901760
        %v332 = vsub.f32 %v193, %v331
        %333 = vmatpush.msra.mxu0 %v332
        %v334 = vand.u32 %v191, 4294901760
        %v335 = vsub.f32 %v191, %v334
        %336 = vmatpush.msra.mxu0 %v335
        %v337 = vand.u32 %v189, 4294901760
        %v338 = vsub.f32 %v189, %v337
        %339 = vmatpush.msra.mxu0 %v338
        %v340 = vand.u32 %v187, 4294901760
        %v341 = vsub.f32 %v187, %v340
        %342 = vmatpush.msra.mxu0 %v341
        %v343 = vand.u32 %v185, 4294901760
        %v344 = vsub.f32 %v185, %v343
        %345 = vmatpush.msra.mxu0 %v344
        %v346 = vand.u32 %v203, 4294901760
        %v347 = vsub.f32 %v203, %v346
        %348 = vmatmul.f32.gmra.mxu0 %v347
        %v349 = vpop.f32.mrf.mxu0
        %v350 = vadd.f32 %v308, %v349
        %v351 = vand.u32 %v206, 4294901760
        %v352 = vsub.f32 %v206, %v351
        %353 = vmatmul.f32.gmra.mxu0 %v352
        %v354 = vpop.f32.mrf.mxu0
        %v355 = vadd.f32 %v312, %v354
        %356 = vdwg.mxu0
        %357 = vmatpush.msra.mxu0 0.0
        %358 = vmatpush.msra.mxu0 0.0
        %359 = vmatpush.msra.mxu0 0.0
        %360 = vmatpush.msra.mxu0 0.0
        %361 = vmatpush.msra.mxu0 0.0
        %362 = vmatpush.msra.mxu0 0.0
        %363 = vmatpush.msra.mxu0 0.0
        %364 = vmatpush.msra.mxu0 0.0
        %v365 = vand.u32 %v199, 4294901760
        %366 = vmatpush.msra.mxu0 %v365
        %v367 = vand.u32 %v197, 4294901760
        %368 = vmatpush.msra.mxu0 %v367
        %v369 = vand.u32 %v195, 4294901760
        %370 = vmatpush.msra.mxu0 %v369
        %v371 = vand.u32 %v193, 4294901760
        %372 = vmatpush.msra.mxu0 %v371
        %v373 = vand.u32 %v191, 4294901760
        %374 = vmatpush.msra.mxu0 %v373
        %v375 = vand.u32 %v189, 4294901760
        %376 = vmatpush.msra.mxu0 %v375
        %v377 = vand.u32 %v187, 4294901760
        %378 = vmatpush.msra.mxu0 %v377
        %v379 = vand.u32 %v185, 4294901760
        %380 = vmatpush.msra.mxu0 %v379
        %v381 = vand.u32 %v203, 4294901760
        %v382 = vsub.f32 %v203, %v381
        %v383 = vand.u32 %v382, 4294901760
        %384 = vmatmul.f32.gmra.mxu0 %v383
        %v385 = vpop.f32.mrf.mxu0
        %v386 = vadd.f32 %v350, %v385
        %v387 = vand.u32 %v206, 4294901760
        %v388 = vsub.f32 %v206, %v387
        %v389 = vand.u32 %v388, 4294901760
        %390 = vmatmul.f32.gmra.mxu0 %v389
        %v391 = vpop.f32.mrf.mxu0
        %v392 = vadd.f32 %v355, %v391
        %393 = vdwg.mxu0
        %394 = vmatpush.msra.mxu0 0.0
        %395 = vmatpush.msra.mxu0 0.0
        %396 = vmatpush.msra.mxu0 0.0
        %397 = vmatpush.msra.mxu0 0.0
        %398 = vmatpush.msra.mxu0 0.0
        %399 = vmatpush.msra.mxu0 0.0
        %400 = vmatpush.msra.mxu0 0.0
        %401 = vmatpush.msra.mxu0 0.0
        %v402 = vand.u32 %v199, 4294901760
        %v403 = vsub.f32 %v199, %v402
        %v404 = vand.u32 %v403, 4294901760
        %405 = vmatpush.msra.mxu0 %v404
        %v406 = vand.u32 %v197, 4294901760
        %v407 = vsub.f32 %v197, %v406
        %v408 = vand.u32 %v407, 4294901760
        %409 = vmatpush.msra.mxu0 %v408
        %v410 = vand.u32 %v195, 4294901760
        %v411 = vsub.f32 %v195, %v410
        %v412 = vand.u32 %v411, 4294901760
        %413 = vmatpush.msra.mxu0 %v412
        %v414 = vand.u32 %v193, 4294901760
        %v415 = vsub.f32 %v193, %v414
        %v416 = vand.u32 %v415, 4294901760
        %417 = vmatpush.msra.mxu0 %v416
        %v418 = vand.u32 %v191, 4294901760
        %v419 = vsub.f32 %v191, %v418
        %v420 = vand.u32 %v419, 4294901760
        %421 = vmatpush.msra.mxu0 %v420
        %v422 = vand.u32 %v189, 4294901760
        %v423 = vsub.f32 %v189, %v422
        %v424 = vand.u32 %v423, 4294901760
        %425 = vmatpush.msra.mxu0 %v424
        %v426 = vand.u32 %v187, 4294901760
        %v427 = vsub.f32 %v187, %v426
        %v428 = vand.u32 %v427, 4294901760
        %429 = vmatpush.msra.mxu0 %v428
        %v430 = vand.u32 %v185, 4294901760
        %v431 = vsub.f32 %v185, %v430
        %v432 = vand.u32 %v431, 4294901760
        %433 = vmatpush.msra.mxu0 %v432
        %v434 = vand.u32 %v203, 4294901760
        %435 = vmatmul.f32.gmra.mxu0 %v434
        %v436 = vpop.f32.mrf.mxu0
        %v437 = vadd.f32 %v386, %v436
        %v438 = vand.u32 %v206, 4294901760
        %439 = vmatmul.f32.gmra.mxu0 %v438
        %v440 = vpop.f32.mrf.mxu0
        %v441 = vadd.f32 %v392, %v440
        %442 = vdwg.mxu0
        %443 = vmatpush.msra.mxu0 0.0
        %444 = vmatpush.msra.mxu0 0.0
        %445 = vmatpush.msra.mxu0 0.0
        %446 = vmatpush.msra.mxu0 0.0
        %447 = vmatpush.msra.mxu0 0.0
        %448 = vmatpush.msra.mxu0 0.0
        %449 = vmatpush.msra.mxu0 0.0
        %450 = vmatpush.msra.mxu0 0.0
        %v451 = vand.u32 %v199, 4294901760
        %452 = vmatpush.msra.mxu0 %v451
        %v453 = vand.u32 %v197, 4294901760
        %454 = vmatpush.msra.mxu0 %v453
        %v455 = vand.u32 %v195, 4294901760
        %456 = vmatpush.msra.mxu0 %v455
        %v457 = vand.u32 %v193, 4294901760
        %458 = vmatpush.msra.mxu0 %v457
        %v459 = vand.u32 %v191, 4294901760
        %460 = vmatpush.msra.mxu0 %v459
        %v461 = vand.u32 %v189, 4294901760
        %462 = vmatpush.msra.mxu0 %v461
        %v463 = vand.u32 %v187, 4294901760
        %464 = vmatpush.msra.mxu0 %v463
        %v465 = vand.u32 %v185, 4294901760
        %466 = vmatpush.msra.mxu0 %v465
        %v467 = vand.u32 %v203, 4294901760
        %468 = vmatmul.f32.gmra.mxu0 %v467
        %v469 = vpop.f32.mrf.mxu0
        %v470 = vadd.f32 %v437, %v469
        %v471 = vand.u32 %v206, 4294901760
        %472 = vmatmul.f32.gmra.mxu0 %v471
        %v473 = vpop.f32.mrf.mxu0
        %v474 = vadd.f32 %v441, %v473
        %475 = vdwg.mxu0
        %476 = vmatpush.msra.mxu0 0.0
        %477 = vmatpush.msra.mxu0 0.0
        %478 = vmatpush.msra.mxu0 0.0
        %479 = vmatpush.msra.mxu0 0.0
        %480 = vmatpush.msra.mxu0 0.0
        %481 = vmatpush.msra.mxu0 0.0
        %482 = vmatpush.msra.mxu0 0.0
        %483 = vmatpush.msra.mxu0 0.0
        %v484 = vand.u32 %v200, 4294901760
        %485 = vmatpush.msra.mxu0 %v484
        %v486 = vand.u32 %v198, 4294901760
        %487 = vmatpush.msra.mxu0 %v486
        %v488 = vand.u32 %v196, 4294901760
        %489 = vmatpush.msra.mxu0 %v488
        %v490 = vand.u32 %v194, 4294901760
        %491 = vmatpush.msra.mxu0 %v490
        %v492 = vand.u32 %v192, 4294901760
        %493 = vmatpush.msra.mxu0 %v492
        %v494 = vand.u32 %v190, 4294901760
        %495 = vmatpush.msra.mxu0 %v494
        %v496 = vand.u32 %v188, 4294901760
        %497 = vmatpush.msra.mxu0 %v496
        %v498 = vand.u32 %v186, 4294901760
        %499 = vmatpush.msra.mxu0 %v498
        %v500 = vand.u32 %v203, 4294901760
        %v501 = vsub.f32 %v203, %v500
        %v502 = vand.u32 %v501, 4294901760
        %v503 = vsub.f32 %v501, %v502
        %v504 = vand.u32 %v503, 4294901760
        %505 = vmatmul.f32.gmra.mxu0 %v504
        %v506 = vpop.f32.mrf.mxu0
        %v507 = vadd.f32 0.0, %v506
        %v508 = vand.u32 %v206, 4294901760
        %v509 = vsub.f32 %v206, %v508
        %v510 = vand.u32 %v509, 4294901760
        %v511 = vsub.f32 %v509, %v510
        %v512 = vand.u32 %v511, 4294901760
        %513 = vmatmul.f32.gmra.mxu0 %v512
        %v514 = vpop.f32.mrf.mxu0
        %v515 = vadd.f32 0.0, %v514
        %516 = vdwg.mxu0
        %517 = vmatpush.msra.mxu0 0.0
        %518 = vmatpush.msra.mxu0 0.0
        %519 = vmatpush.msra.mxu0 0.0
        %520 = vmatpush.msra.mxu0 0.0
        %521 = vmatpush.msra.mxu0 0.0
        %522 = vmatpush.msra.mxu0 0.0
        %523 = vmatpush.msra.mxu0 0.0
        %524 = vmatpush.msra.mxu0 0.0
        %v525 = vand.u32 %v200, 4294901760
        %v526 = vsub.f32 %v200, %v525
        %v527 = vand.u32 %v526, 4294901760
        %v528 = vsub.f32 %v526, %v527
        %v529 = vand.u32 %v528, 4294901760
        %530 = vmatpush.msra.mxu0 %v529
        %v531 = vand.u32 %v198, 4294901760
        %v532 = vsub.f32 %v198, %v531
        %v533 = vand.u32 %v532, 4294901760
        %v534 = vsub.f32 %v532, %v533
        %v535 = vand.u32 %v534, 4294901760
        %536 = vmatpush.msra.mxu0 %v535
        %v537 = vand.u32 %v196, 4294901760
        %v538 = vsub.f32 %v196, %v537
        %v539 = vand.u32 %v538, 4294901760
        %v540 = vsub.f32 %v538, %v539
        %v541 = vand.u32 %v540, 4294901760
        %542 = vmatpush.msra.mxu0 %v541
        %v543 = vand.u32 %v194, 4294901760
        %v544 = vsub.f32 %v194, %v543
        %v545 = vand.u32 %v544, 4294901760
        %v546 = vsub.f32 %v544, %v545
        %v547 = vand.u32 %v546, 4294901760
        %548 = vmatpush.msra.mxu0 %v547
        %v549 = vand.u32 %v192, 4294901760
        %v550 = vsub.f32 %v192, %v549
        %v551 = vand.u32 %v550, 4294901760
        %v552 = vsub.f32 %v550, %v551
        %v553 = vand.u32 %v552, 4294901760
        %554 = vmatpush.msra.mxu0 %v553
        %v555 = vand.u32 %v190, 4294901760
        %v556 = vsub.f32 %v190, %v555
        %v557 = vand.u32 %v556, 4294901760
        %v558 = vsub.f32 %v556, %v557
        %v559 = vand.u32 %v558, 4294901760
        %560 = vmatpush.msra.mxu0 %v559
        %v561 = vand.u32 %v188, 4294901760
        %v562 = vsub.f32 %v188, %v561
        %v563 = vand.u32 %v562, 4294901760
        %v564 = vsub.f32 %v562, %v563
        %v565 = vand.u32 %v564, 4294901760
        %566 = vmatpush.msra.mxu0 %v565
        %v567 = vand.u32 %v186, 4294901760
        %v568 = vsub.f32 %v186, %v567
        %v569 = vand.u32 %v568, 4294901760
        %v570 = vsub.f32 %v568, %v569
        %v571 = vand.u32 %v570, 4294901760
        %572 = vmatpush.msra.mxu0 %v571
        %v573 = vand.u32 %v203, 4294901760
        %574 = vmatmul.f32.gmra.mxu0 %v573
        %v575 = vpop.f32.mrf.mxu0
        %v576 = vadd.f32 %v507, %v575
        %v577 = vand.u32 %v206, 4294901760
        %578 = vmatmul.f32.gmra.mxu0 %v577
        %v579 = vpop.f32.mrf.mxu0
        %v580 = vadd.f32 %v515, %v579
        %581 = vdwg.mxu0
        %582 = vmatpush.msra.mxu0 0.0
        %583 = vmatpush.msra.mxu0 0.0
        %584 = vmatpush.msra.mxu0 0.0
        %585 = vmatpush.msra.mxu0 0.0
        %586 = vmatpush.msra.mxu0 0.0
        %587 = vmatpush.msra.mxu0 0.0
        %588 = vmatpush.msra.mxu0 0.0
        %589 = vmatpush.msra.mxu0 0.0
        %v590 = vand.u32 %v200, 4294901760
        %v591 = vsub.f32 %v200, %v590
        %592 = vmatpush.msra.mxu0 %v591
        %v593 = vand.u32 %v198, 4294901760
        %v594 = vsub.f32 %v198, %v593
        %595 = vmatpush.msra.mxu0 %v594
        %v596 = vand.u32 %v196, 4294901760
        %v597 = vsub.f32 %v196, %v596
        %598 = vmatpush.msra.mxu0 %v597
        %v599 = vand.u32 %v194, 4294901760
        %v600 = vsub.f32 %v194, %v599
        %601 = vmatpush.msra.mxu0 %v600
        %v602 = vand.u32 %v192, 4294901760
        %v603 = vsub.f32 %v192, %v602
        %604 = vmatpush.msra.mxu0 %v603
        %v605 = vand.u32 %v190, 4294901760
        %v606 = vsub.f32 %v190, %v605
        %607 = vmatpush.msra.mxu0 %v606
        %v608 = vand.u32 %v188, 4294901760
        %v609 = vsub.f32 %v188, %v608
        %610 = vmatpush.msra.mxu0 %v609
        %v611 = vand.u32 %v186, 4294901760
        %v612 = vsub.f32 %v186, %v611
        %613 = vmatpush.msra.mxu0 %v612
        %v614 = vand.u32 %v203, 4294901760
        %v615 = vsub.f32 %v203, %v614
        %616 = vmatmul.f32.gmra.mxu0 %v615
        %v617 = vpop.f32.mrf.mxu0
        %v618 = vadd.f32 %v576, %v617
        %v619 = vand.u32 %v206, 4294901760
        %v620 = vsub.f32 %v206, %v619
        %621 = vmatmul.f32.gmra.mxu0 %v620
        %v622 = vpop.f32.mrf.mxu0
        %v623 = vadd.f32 %v580, %v622
        %624 = vdwg.mxu0
        %625 = vmatpush.msra.mxu0 0.0
        %626 = vmatpush.msra.mxu0 0.0
        %627 = vmatpush.msra.mxu0 0.0
        %628 = vmatpush.msra.mxu0 0.0
        %629 = vmatpush.msra.mxu0 0.0
        %630 = vmatpush.msra.mxu0 0.0
        %631 = vmatpush.msra.mxu0 0.0
        %632 = vmatpush.msra.mxu0 0.0
        %v633 = vand.u32 %v200, 4294901760
        %634 = vmatpush.msra.mxu0 %v633
        %v635 = vand.u32 %v198, 4294901760
        %636 = vmatpush.msra.mxu0 %v635
        %v637 = vand.u32 %v196, 4294901760
        %638 = vmatpush.msra.mxu0 %v637
        %v639 = vand.u32 %v194, 4294901760
        %640 = vmatpush.msra.mxu0 %v639
        %v641 = vand.u32 %v192, 4294901760
        %642 = vmatpush.msra.mxu0 %v641
        %v643 = vand.u32 %v190, 4294901760
        %644 = vmatpush.msra.mxu0 %v643
        %v645 = vand.u32 %v188, 4294901760
        %646 = vmatpush.msra.mxu0 %v645
        %v647 = vand.u32 %v186, 4294901760
        %648 = vmatpush.msra.mxu0 %v647
        %v649 = vand.u32 %v203, 4294901760
        %v650 = vsub.f32 %v203, %v649
        %v651 = vand.u32 %v650, 4294901760
        %652 = vmatmul.f32.gmra.mxu0 %v651
        %v653 = vpop.f32.mrf.mxu0
        %v654 = vadd.f32 %v618, %v653
        %v655 = vand.u32 %v206, 4294901760
        %v656 = vsub.f32 %v206, %v655
        %v657 = vand.u32 %v656, 4294901760
        %658 = vmatmul.f32.gmra.mxu0 %v657
        %v659 = vpop.f32.mrf.mxu0
        %v660 = vadd.f32 %v623, %v659
        %661 = vdwg.mxu0
        %662 = vmatpush.msra.mxu0 0.0
        %663 = vmatpush.msra.mxu0 0.0
        %664 = vmatpush.msra.mxu0 0.0
        %665 = vmatpush.msra.mxu0 0.0
        %666 = vmatpush.msra.mxu0 0.0
        %667 = vmatpush.msra.mxu0 0.0
        %668 = vmatpush.msra.mxu0 0.0
        %669 = vmatpush.msra.mxu0 0.0
        %v670 = vand.u32 %v200, 4294901760
        %v671 = vsub.f32 %v200, %v670
        %v672 = vand.u32 %v671, 4294901760
        %673 = vmatpush.msra.mxu0 %v672
        %v674 = vand.u32 %v198, 4294901760
        %v675 = vsub.f32 %v198, %v674
        %v676 = vand.u32 %v675, 4294901760
        %677 = vmatpush.msra.mxu0 %v676
        %v678 = vand.u32 %v196, 4294901760
        %v679 = vsub.f32 %v196, %v678
        %v680 = vand.u32 %v679, 4294901760
        %681 = vmatpush.msra.mxu0 %v680
        %v682 = vand.u32 %v194, 4294901760
        %v683 = vsub.f32 %v194, %v682
        %v684 = vand.u32 %v683, 4294901760
        %685 = vmatpush.msra.mxu0 %v684
        %v686 = vand.u32 %v192, 4294901760
        %v687 = vsub.f32 %v192, %v686
        %v688 = vand.u32 %v687, 4294901760
        %689 = vmatpush.msra.mxu0 %v688
        %v690 = vand.u32 %v190, 4294901760
        %v691 = vsub.f32 %v190, %v690
        %v692 = vand.u32 %v691, 4294901760
        %693 = vmatpush.msra.mxu0 %v692
        %v694 = vand.u32 %v188, 4294901760
        %v695 = vsub.f32 %v188, %v694
        %v696 = vand.u32 %v695, 4294901760
        %697 = vmatpush.msra.mxu0 %v696
        %v698 = vand.u32 %v186, 4294901760
        %v699 = vsub.f32 %v186, %v698
        %v700 = vand.u32 %v699, 4294901760
        %701 = vmatpush.msra.mxu0 %v700
        %v702 = vand.u32 %v203, 4294901760
        %703 = vmatmul.f32.gmra.mxu0 %v702
        %v704 = vpop.f32.mrf.mxu0
        %v705 = vadd.f32 %v654, %v704
        %v706 = vand.u32 %v206, 4294901760
        %707 = vmatmul.f32.gmra.mxu0 %v706
        %v708 = vpop.f32.mrf.mxu0
        %v709 = vadd.f32 %v660, %v708
        %710 = vdwg.mxu0
        %711 = vmatpush.msra.mxu0 0.0
        %712 = vmatpush.msra.mxu0 0.0
        %713 = vmatpush.msra.mxu0 0.0
        %714 = vmatpush.msra.mxu0 0.0
        %715 = vmatpush.msra.mxu0 0.0
        %716 = vmatpush.msra.mxu0 0.0
        %717 = vmatpush.msra.mxu0 0.0
        %718 = vmatpush.msra.mxu0 0.0
        %v719 = vand.u32 %v200, 4294901760
        %720 = vmatpush.msra.mxu0 %v719
        %v721 = vand.u32 %v198, 4294901760
        %722 = vmatpush.msra.mxu0 %v721
        %v723 = vand.u32 %v196, 4294901760
        %724 = vmatpush.msra.mxu0 %v723
        %v725 = vand.u32 %v194, 4294901760
        %726 = vmatpush.msra.mxu0 %v725
        %v727 = vand.u32 %v192, 4294901760
        %728 = vmatpush.msra.mxu0 %v727
        %v729 = vand.u32 %v190, 4294901760
        %730 = vmatpush.msra.mxu0 %v729
        %v731 = vand.u32 %v188, 4294901760
        %732 = vmatpush.msra.mxu0 %v731
        %v733 = vand.u32 %v186, 4294901760
        %734 = vmatpush.msra.mxu0 %v733
        %v735 = vand.u32 %v203, 4294901760
        %736 = vmatmul.f32.gmra.mxu0 %v735
        %v737 = vpop.f32.mrf.mxu0
        %v738 = vadd.f32 %v705, %v737
        %v739 = vand.u32 %v206, 4294901760
        %740 = vmatmul.f32.gmra.mxu0 %v739
        %v741 = vpop.f32.mrf.mxu0
        %v742 = vadd.f32 %v709, %v741
        %743 = vdwg.mxu0
        %744 = vst [vmem:[%s180] sm:$0xff] %v470
        %745 = vst [vmem:[%s180 + $0x8] sm:$0xff] %v738
        %746 = vst [vmem:[%s180 + $0x10] sm:$0xff] %v474
        %747 = vst [vmem:[%s180 + $0x18] sm:$0xff] %v742
        %s748 = sand.u32 %s75, 1
        %s749 = scalar_lea.sflag [#allocation4], %s748
        %s750 = sand.u32 %s75, 1
        %s751 = smul.addr %s750, 32
        %s752 = scalar_lea.vmem [#allocation7], %s751
        // Predicated region
        $region37: #{tpu_custom_call.1} parent=27 // pred_check
          %p753 = pneg %p85
        $region38: #{tpu_custom_call.1} parent=27 // pred_check_branch
          %755 = sbr.rel (%p753) target = $region40
        $region39: #{tpu_custom_call.1} parent=27 // pred_region
          %s756 = smul.u32 2, %s20
          %758 = vsyncadd %s749, 0
          %s759 = smul.addr %s756, 2
          %s760 = smul.addr %s759, 8
          %s761 = scalar_lea.hbm %s2, %s760
          %s762 = sshll.u32 %s752, 4
          %s763 = int_to_ptr.vmem [resolvable:$true] %s762
          %s764 = sshll.u32 %s761, 4
          %s765 = int_to_ptr.hbm [resolvable:$true] %s764
          %770 = dma.vmem_to_hbm [thread:$0]  %s763, 512, %s765, %s749, 256, 256, 16
        $region40: #{tpu_custom_call.1} parent=27 // pred_fallthru
          _
      $region28: #{tpu_custom_call.1} parent=5 // pred_fallthru
        _
      %p771 = scmp.le.s32.totalorder 2, %s15
      // Predicated region
      $region41: #{tpu_custom_call.1} parent=5 // pred_check
        %p772 = pneg %p771
      $region42: #{tpu_custom_call.1} parent=5 // pred_check_branch
        %774 = sbr.rel (%p772) target = $region44
      $region43: #{tpu_custom_call.1} parent=5 // pred_region
        %s775 = ssub.s32 %s15, 2
        // Predicated region
        $region45: #{tpu_custom_call.1} parent=43 // pred_check
          %p776 = pneg %p91
        $region46: #{tpu_custom_call.1} parent=43 // pred_check_branch
          %778 = sbr.rel (%p776) target = $region48
        $region47: #{tpu_custom_call.1} parent=43 // pred_region
          %s779 = sand.u32 %s76, 1
          %s780 = scalar_lea.sflag [#allocation4], %s779
          %s781 = sand.u32 %s76, 1
          %s782 = smul.addr %s781, 32
          %s783 = scalar_lea.vmem [#allocation7], %s782
          %785 = dma.done %s780, 512
        $region48: #{tpu_custom_call.1} parent=43 // pred_fallthru
          _
      $region44: #{tpu_custom_call.1} parent=5 // pred_fallthru
        _
    $region6: #{tpu_custom_call.1} parent=1 // loop_footer
      %s19 = sadd.s32 1, %s15
    $region7: #{tpu_custom_call.1} parent=1 // loop_footer_branch
      %14 = sbr.rel target = $region3
    $region8: #{tpu_custom_call.1} parent=1 // loop_exit
      _
    %786 = vsyncpa [#allocation3], 1
    %s787 = scalar_lea.sflag [#allocation3], 1
    %788 = vsyncpa %s787, 1
    %789 = vsyncpa [#allocation6], 1
    %790 = vsyncpa [#allocation4], 1
    %s791 = scalar_lea.sflag [#allocation4], 1
    %792 = vsyncpa %s791, 1

</llo_original>
